<compile_context>
chip_gen: v5e
topology: v5e:2x2
jax: 0.10.0
libtpu: 0.0.40
codegen_flags: <defaults>
</compile_context>

<pallas_src>
import jax
import jax.numpy as jnp
from jax.experimental import pallas as pl
from jax.experimental.pallas import tpu as pltpu

# MLP layer dims (from nn.Sequential in DeepMLP.__init__)
DIMS = [2, 128, 128, 64, 32, 2]
PAD = 128          # padded feature width (lane-dense)
N_LAYERS = len(DIMS) - 1


def deep_mlp_kernel(x_ref, w_ref, b_ref, o_ref):
    # x_ref: [TB, 2] f32   w_ref: [5, 128, 128] bf16   b_ref: [5, 1, 128] f32
    # o_ref: [TB, 2]  f32  (narrow output block -> ~20 B/row HBM writeback)
    x = x_ref[...]                                           # [TB, 2] f32

    # ---- Layer 1 (in=2): two VPU FMAs; slice the 2 live rows before casting --
    w1 = w_ref[0, 0:2, :].astype(jnp.float32)                # [2, 128]
    h = (x[:, 0:1] * w1[0:1, :]
         + x[:, 1:2] * w1[1:2, :]
         + b_ref[0])                                         # [TB, 128] f32
    h = jnp.maximum(h, 0.0)

    # ---- Layers 2..5: bf16 MXU matmuls with f32 accumulation -----------------
    for l in range(1, N_LAYERS):
        h = jnp.dot(h.astype(jnp.bfloat16), w_ref[l],
                    preferred_element_type=jnp.float32) + b_ref[l]
        if l < N_LAYERS - 1:
            h = jnp.maximum(h, 0.0)

    # Only the first DIMS[-1]=2 columns are real; store them directly.
    o_ref[...] = h[:, 0:DIMS[-1]].astype(o_ref.dtype)


def pack_params(params):
    """Pack per-layer (W [in,out], b [1,out]) into zero-padded dense slabs."""
    w_packed = jnp.zeros((N_LAYERS, PAD, PAD), jnp.float32)
    b_packed = jnp.zeros((N_LAYERS, 1, PAD), jnp.float32)
    for l, (w, b) in enumerate(params):
        fin, fout = w.shape
        w_packed = w_packed.at[l, :fin, :fout].set(w)
        b_packed = b_packed.at[l, 0, :fout].set(b.reshape(-1))
    # Weights live in bf16 (MXU-native, half the VMEM/DMA footprint); zeros stay exact.
    return w_packed.astype(jnp.bfloat16), b_packed


def _round_up(v, m):
    return ((v + m - 1) // m) * m


def deep_mlp(x, w_packed, b_packed, *, tb=2048):
    """x: [B, 2] float32; w_packed: [5,128,128] bf16; b_packed: [5,1,128] f32."""
    B = x.shape[0]
    # Batch tile: as large as `tb` (amortizes per-step overhead), but never
    # larger than half the (rounded) batch, so the grid has >=2 steps whenever
    # B > 8 -> both v7x TensorCores get work via the "parallel" batch axis.
    TB = max(8, min(tb, _round_up((B + 1) // 2, 8)))
    Bp = _round_up(B, TB)
    if Bp != B:
        x = jnp.pad(x, ((0, Bp - B), (0, 0)))                # zero tail rows; sliced off below

    out = pl.pallas_call(
        deep_mlp_kernel,
        out_shape=jax.ShapeDtypeStruct((Bp, DIMS[-1]), jnp.float32),
        grid=(Bp // TB,),
        in_specs=[
            pl.BlockSpec((TB, DIMS[0]), lambda i: (i, 0)),                # x tile
            pl.BlockSpec((N_LAYERS, PAD, PAD), lambda i: (0, 0, 0),       # weights: constant
                         pipeline_mode=pl.Buffered(1)),                   #   -> single buffer
            pl.BlockSpec((N_LAYERS, 1, PAD), lambda i: (0, 0, 0),         # biases: constant
                         pipeline_mode=pl.Buffered(1)),
        ],
        out_specs=pl.BlockSpec((TB, DIMS[-1]), lambda i: (i, 0)),         # narrow (TB,2) output
        compiler_params=pltpu.CompilerParams(
            dimension_semantics=("parallel",)),                           # megacore on v7x
    )(x, w_packed, b_packed)

    return out[:B] if Bp != B else out


def init_params(key):
    """Deterministic init mimicking PyTorch's default Linear init
    (uniform in +-1/sqrt(fan_in)); weights stored as [in, out]."""
    params = []
    for i in range(N_LAYERS):
        fan_in, fan_out = DIMS[i], DIMS[i + 1]
        key, kw, kb = jax.random.split(key, 3)
        bound = 1.0 / jnp.sqrt(jnp.float32(fan_in))
        w = jax.random.uniform(kw, (fan_in, fan_out), jnp.float32, -bound, bound)
        b = jax.random.uniform(kb, (1, fan_out), jnp.float32, -bound, bound)
        params.append((w, b))
    return params


def reference_mlp(x, params):
    h = x
    for i, (w, b) in enumerate(params):
        h = h @ w + b
        if i < len(params) - 1:
            h = jnp.maximum(h, 0.0)
    return h


if __name__ == "__main__":
    key = jax.random.PRNGKey(0)
    kx, kp = jax.random.split(key)

    B = 16                                      # TB=8 -> 2 grid steps (exercises the pipeline)
    x = jax.random.normal(kx, (B, DIMS[0]), dtype=jnp.float32)
    params = init_params(kp)
    w_packed, b_packed = pack_params(params)

    out = deep_mlp(x, w_packed, b_packed)
    out = jax.block_until_ready(out)

    ref = reference_mlp(x, params)
    assert out.shape == (B, DIMS[-1])
    # bf16 matmul inputs/weights with f32 accumulation -> relaxed tolerance vs f32 reference.
    assert jnp.allclose(out, ref, atol=5e-2, rtol=5e-2)

    print("KERNEL_OK")
</pallas_src>

<mosaic_0001>
module attributes {stable_mosaic.version = 11 : i64} {
  func.func @deep_mlp_kernel(%arg0: i32, %arg1: memref<8x2xf32, #tpu.memory_space<vmem>>, %arg2: memref<5x128x128xbf16, #tpu.memory_space<vmem>>, %arg3: memref<5x1x128xf32, #tpu.memory_space<vmem>>, %arg4: memref<8x2xf32, #tpu.memory_space<vmem>>) attributes {dimension_semantics = [#tpu.dimension_semantics<parallel>], iteration_bounds = array<i64: 2>, scalar_prefetch = 0 : i64, scratch_operands = 0 : i64, tpu.core_type = #tpu.core_type<tc>, window_params = [{transform_indices = @transform_0, window_bounds = array<i64: 8, 2>}, {pipeline_mode = #tpu.pipeline_mode<synchronous>, transform_indices = @transform_1, window_bounds = array<i64: 5, 128, 128>}, {pipeline_mode = #tpu.pipeline_mode<synchronous>, transform_indices = @transform_2, window_bounds = array<i64: 5, 1, 128>}, {transform_indices = @transform_3, window_bounds = array<i64: 8, 2>}]} {
    %c0 = arith.constant 0 : index
    %c0_0 = arith.constant 0 : index
    %0 = vector.load %arg1[%c0, %c0_0] : memref<8x2xf32, #tpu.memory_space<vmem>>, vector<8x2xf32>
    %c0_1 = arith.constant 0 : index
    %c0_2 = arith.constant 0 : index
    %c0_3 = arith.constant 0 : index
    %1 = vector.load %arg2[%c0_1, %c0_2, %c0_3] : memref<5x128x128xbf16, #tpu.memory_space<vmem>>, vector<1x2x128xbf16>
    %2 = vector.shape_cast %1 : vector<1x2x128xbf16> to vector<2x128xbf16>
    %3 = arith.extf %2 : vector<2x128xbf16> to vector<2x128xf32>
    %4 = vector.extract_strided_slice %0 {offsets = [0, 0], sizes = [8, 1], strides = [1, 1]} : vector<8x2xf32> to vector<8x1xf32>
    %5 = vector.extract_strided_slice %3 {offsets = [0, 0], sizes = [1, 128], strides = [1, 1]} : vector<2x128xf32> to vector<1x128xf32>
    %6 = vector.broadcast %4 : vector<8x1xf32> to vector<8x128xf32>
    %7 = vector.broadcast %5 : vector<1x128xf32> to vector<8x128xf32>
    %8 = arith.mulf %6, %7 : vector<8x128xf32>
    %9 = vector.extract_strided_slice %0 {offsets = [0, 1], sizes = [8, 1], strides = [1, 1]} : vector<8x2xf32> to vector<8x1xf32>
    %10 = vector.extract_strided_slice %3 {offsets = [1, 0], sizes = [1, 128], strides = [1, 1]} : vector<2x128xf32> to vector<1x128xf32>
    %11 = vector.broadcast %9 : vector<8x1xf32> to vector<8x128xf32>
    %12 = vector.broadcast %10 : vector<1x128xf32> to vector<8x128xf32>
    %13 = arith.mulf %11, %12 : vector<8x128xf32>
    %14 = arith.addf %8, %13 : vector<8x128xf32>
    %c0_4 = arith.constant 0 : index
    %c0_5 = arith.constant 0 : index
    %c0_6 = arith.constant 0 : index
    %15 = vector.load %arg3[%c0_4, %c0_5, %c0_6] : memref<5x1x128xf32, #tpu.memory_space<vmem>>, vector<1x1x128xf32>
    %16 = vector.shape_cast %15 : vector<1x1x128xf32> to vector<1x128xf32>
    %17 = vector.broadcast %16 : vector<1x128xf32> to vector<8x128xf32>
    %18 = arith.addf %14, %17 : vector<8x128xf32>
    %cst = arith.constant 0.000000e+00 : f32
    %19 = vector.broadcast %cst : f32 to vector<8x128xf32>
    %20 = arith.maximumf %18, %19 : vector<8x128xf32>
    %21 = arith.truncf %20 : vector<8x128xf32> to vector<8x128xbf16>
    %c1 = arith.constant 1 : index
    %c0_7 = arith.constant 0 : index
    %c0_8 = arith.constant 0 : index
    %22 = vector.load %arg2[%c1, %c0_7, %c0_8] : memref<5x128x128xbf16, #tpu.memory_space<vmem>>, vector<1x128x128xbf16>
    %23 = vector.shape_cast %22 : vector<1x128x128xbf16> to vector<128x128xbf16>
    %cst_9 = arith.constant dense<0.000000e+00> : vector<8x128xf32>
    %24 = tpu.matmul %21, %23, %cst_9 {dimension_numbers = #tpu.dot_dimension_numbers<[1], [0], [0], [1], [0, 0, 1, 1], [], []>} : vector<8x128xbf16>, vector<128x128xbf16>, vector<8x128xf32> -> vector<8x128xf32>
    %c1_10 = arith.constant 1 : index
    %c0_11 = arith.constant 0 : index
    %c0_12 = arith.constant 0 : index
    %25 = vector.load %arg3[%c1_10, %c0_11, %c0_12] : memref<5x1x128xf32, #tpu.memory_space<vmem>>, vector<1x1x128xf32>
    %26 = vector.shape_cast %25 : vector<1x1x128xf32> to vector<1x128xf32>
    %27 = vector.broadcast %26 : vector<1x128xf32> to vector<8x128xf32>
    %28 = arith.addf %24, %27 : vector<8x128xf32>
    %cst_13 = arith.constant 0.000000e+00 : f32
    %29 = vector.broadcast %cst_13 : f32 to vector<8x128xf32>
    %30 = arith.maximumf %28, %29 : vector<8x128xf32>
    %31 = arith.truncf %30 : vector<8x128xf32> to vector<8x128xbf16>
    %c2 = arith.constant 2 : index
    %c0_14 = arith.constant 0 : index
    %c0_15 = arith.constant 0 : index
    %32 = vector.load %arg2[%c2, %c0_14, %c0_15] : memref<5x128x128xbf16, #tpu.memory_space<vmem>>, vector<1x128x128xbf16>
    %33 = vector.shape_cast %32 : vector<1x128x128xbf16> to vector<128x128xbf16>
    %cst_16 = arith.constant dense<0.000000e+00> : vector<8x128xf32>
    %34 = tpu.matmul %31, %33, %cst_16 {dimension_numbers = #tpu.dot_dimension_numbers<[1], [0], [0], [1], [0, 0, 1, 1], [], []>} : vector<8x128xbf16>, vector<128x128xbf16>, vector<8x128xf32> -> vector<8x128xf32>
    %c2_17 = arith.constant 2 : index
    %c0_18 = arith.constant 0 : index
    %c0_19 = arith.constant 0 : index
    %35 = vector.load %arg3[%c2_17, %c0_18, %c0_19] : memref<5x1x128xf32, #tpu.memory_space<vmem>>, vector<1x1x128xf32>
    %36 = vector.shape_cast %35 : vector<1x1x128xf32> to vector<1x128xf32>
    %37 = vector.broadcast %36 : vector<1x128xf32> to vector<8x128xf32>
    %38 = arith.addf %34, %37 : vector<8x128xf32>
    %cst_20 = arith.constant 0.000000e+00 : f32
    %39 = vector.broadcast %cst_20 : f32 to vector<8x128xf32>
    %40 = arith.maximumf %38, %39 : vector<8x128xf32>
    %41 = arith.truncf %40 : vector<8x128xf32> to vector<8x128xbf16>
    %c3 = arith.constant 3 : index
    %c0_21 = arith.constant 0 : index
    %c0_22 = arith.constant 0 : index
    %42 = vector.load %arg2[%c3, %c0_21, %c0_22] : memref<5x128x128xbf16, #tpu.memory_space<vmem>>, vector<1x128x128xbf16>
    %43 = vector.shape_cast %42 : vector<1x128x128xbf16> to vector<128x128xbf16>
    %cst_23 = arith.constant dense<0.000000e+00> : vector<8x128xf32>
    %44 = tpu.matmul %41, %43, %cst_23 {dimension_numbers = #tpu.dot_dimension_numbers<[1], [0], [0], [1], [0, 0, 1, 1], [], []>} : vector<8x128xbf16>, vector<128x128xbf16>, vector<8x128xf32> -> vector<8x128xf32>
    %c3_24 = arith.constant 3 : index
    %c0_25 = arith.constant 0 : index
    %c0_26 = arith.constant 0 : index
    %45 = vector.load %arg3[%c3_24, %c0_25, %c0_26] : memref<5x1x128xf32, #tpu.memory_space<vmem>>, vector<1x1x128xf32>
    %46 = vector.shape_cast %45 : vector<1x1x128xf32> to vector<1x128xf32>
    %47 = vector.broadcast %46 : vector<1x128xf32> to vector<8x128xf32>
    %48 = arith.addf %44, %47 : vector<8x128xf32>
    %cst_27 = arith.constant 0.000000e+00 : f32
    %49 = vector.broadcast %cst_27 : f32 to vector<8x128xf32>
    %50 = arith.maximumf %48, %49 : vector<8x128xf32>
    %51 = arith.truncf %50 : vector<8x128xf32> to vector<8x128xbf16>
    %c4 = arith.constant 4 : index
    %c0_28 = arith.constant 0 : index
    %c0_29 = arith.constant 0 : index
    %52 = vector.load %arg2[%c4, %c0_28, %c0_29] : memref<5x128x128xbf16, #tpu.memory_space<vmem>>, vector<1x128x128xbf16>
    %53 = vector.shape_cast %52 : vector<1x128x128xbf16> to vector<128x128xbf16>
    %cst_30 = arith.constant dense<0.000000e+00> : vector<8x128xf32>
    %54 = tpu.matmul %51, %53, %cst_30 {dimension_numbers = #tpu.dot_dimension_numbers<[1], [0], [0], [1], [0, 0, 1, 1], [], []>} : vector<8x128xbf16>, vector<128x128xbf16>, vector<8x128xf32> -> vector<8x128xf32>
    %c4_31 = arith.constant 4 : index
    %c0_32 = arith.constant 0 : index
    %c0_33 = arith.constant 0 : index
    %55 = vector.load %arg3[%c4_31, %c0_32, %c0_33] : memref<5x1x128xf32, #tpu.memory_space<vmem>>, vector<1x1x128xf32>
    %56 = vector.shape_cast %55 : vector<1x1x128xf32> to vector<1x128xf32>
    %57 = vector.broadcast %56 : vector<1x128xf32> to vector<8x128xf32>
    %58 = arith.addf %54, %57 : vector<8x128xf32>
    %59 = vector.extract_strided_slice %58 {offsets = [0, 0], sizes = [8, 2], strides = [1, 1]} : vector<8x128xf32> to vector<8x2xf32>
    %c0_34 = arith.constant 0 : index
    %c0_35 = arith.constant 0 : index
    %60 = vector.load %arg4[%c0_34, %c0_35] : memref<8x2xf32, #tpu.memory_space<vmem>>, vector<8x2xf32>
    tpu.vector_store %arg4[%c0_34, %c0_35], %59 {strides = array<i32>} : memref<8x2xf32, #tpu.memory_space<vmem>>, vector<8x2xf32>,
    return
  }
  func.func @transform_0(%arg0: i32) -> (i32, i32) {
    %c0_i32 = arith.constant 0 : i32
    %c0_i32_0 = arith.constant 0 : i32
    return %arg0, %c0_i32 : i32, i32
  }
  func.func @transform_1(%arg0: i32) -> (i32, i32, i32) {
    %c0_i32 = arith.constant 0 : i32
    %c0_i32_0 = arith.constant 0 : i32
    %c0_i32_1 = arith.constant 0 : i32
    %c0_i32_2 = arith.constant 0 : i32
    return %c0_i32, %c0_i32_0, %c0_i32_1 : i32, i32, i32
  }
  func.func @transform_2(%arg0: i32) -> (i32, i32, i32) {
    %c0_i32 = arith.constant 0 : i32
    %c0_i32_0 = arith.constant 0 : i32
    %c0_i32_1 = arith.constant 0 : i32
    %c0_i32_2 = arith.constant 0 : i32
    return %c0_i32, %c0_i32_0, %c0_i32_1 : i32, i32, i32
  }
  func.func @transform_3(%arg0: i32) -> (i32, i32) {
    %c0_i32 = arith.constant 0 : i32
    %c0_i32_0 = arith.constant 0 : i32
    return %arg0, %c0_i32 : i32, i32
  }
}

</mosaic_0001>

<llo_original>
// kernel: tpu_custom_call.1
$region0: #{tpu_custom_call.1}
  #allocation0 [shape = 'u32[]', space=smem, size = 0x4, offset = 0x4, fixed_abs, tag = 'smem constant byte address 0x4 - core index']
  #allocation1 [shape = 'u32[72,128]{1,0:T(1,128)}', space=vmem, size = 0x9000, scoped, tag = 'internal scratch']
  %s0 = inlined_call_operand.vmem [shape: f32[16,2], index: 0, kind: input, shape index: {}]
  %s1 = inlined_call_operand.hbm [shape: bf16[5,128,128], index: 1, kind: input, shape index: {}]
  %s2 = inlined_call_operand.vmem [shape: f32[5,1,128], index: 2, kind: input, shape index: {}]
  %s3 = inlined_call_operand.vmem [shape: f32[16,2], index: 3, kind: output, shape index: {}]
  %s4 = sld [smem:[#allocation0]]
  $region49: #{tpu_custom_call.1} parent=0
    _
  %s6 = ssub.s32 1, %s4
  %s7 = scalar_select 0, %s6, %s4
  $region1: #{tpu_custom_call.1} parent=0
    #allocation2 [shape = 'u8[163840]{0}', space=vmem, size = 0x28000, scoped, tag = 'input window, operand 1, single buffered']
    #allocation3 [shape = 's32[2]{0}', space=sflag, size = 0x8, scoped, tag = 'scoped memory for tpu_custom_call.1']
    %8 = vsyncpa [#allocation3], 0
    loop: start=0, step=1, limit=4
    $region2: #{tpu_custom_call.1} parent=1 // loop_pre_header
      _
    $region3: #{tpu_custom_call.1} parent=1 // loop_header
      %s10 = sphi 0, %s14
      %p11 = scmp.ge.s32.totalorder %s10, 4
      %s20 = sphi 0, %s22
      %s23 = sphi 0, %s20
      %s24 = sphi 0, %s23
      %s40 = sphi 0, %s24
      %s44 = sphi 0, %s44
      %s46 = sphi 0, %s44
      %s47 = sphi 0, %s46
      %s61 = sphi 0, %s47
      %s65 = sphi 0, %s65
      %s67 = sphi 0, %s65
      %s68 = sphi 0, %s67
      %s82 = sphi 0, %s68
      %s88 = sphi 0, %s90
      %s91 = sphi 0, %s88
      %s92 = sphi 0, %s91
      %s108 = sphi 0, %s92
    $region4: #{tpu_custom_call.1} parent=1 // loop_header_branch
      %13 = sbr.rel (%p11) target = $region8
    $region5: #{tpu_custom_call.1} parent=1 // loop_body
      %s15 = ssub.s32 %s10, 1
      %s16 = ssub.s32 %s10, 2
      %s17 = sadd.s32 %s10, 1
      %s18 = ssub.s32 %s10, %s17
      %p19 = scmp.eq.s32.totalorder %s18, 0
      %s21 = sadd.s32 %s20, 1
      %s22 = scalar_select %p19, %s20, %s21
      %p25 = pneg %p19
      %p26 = scmp.eq.s32.totalorder %s10, 1
      %p27 = por %p25, %p26
      %p28 = scmp.ne.s32.totalorder %s20, %s23
      %p29 = scmp.eq.s32.totalorder %s10, 0
      %p30 = por %p28, %p29
      %p31 = scmp.ne.s32.totalorder %s20, %s23
      %p32 = scmp.eq.s32.totalorder %s15, 1
      %p33 = por %p31, %p32
      %p34 = scmp.ne.s32.totalorder %s23, %s24
      %p35 = scmp.eq.s32.totalorder %s15, 0
      %p36 = por %p34, %p35
      %p37 = scmp.ne.s32.totalorder %s23, %s24
      %p38 = scmp.eq.s32.totalorder %s16, 1
      %p39 = por %p37, %p38
      %p41 = scmp.ne.s32.totalorder %s24, %s40
      %p42 = scmp.eq.s32.totalorder %s16, 0
      %p43 = por %p41, %p42
      %s45 = sadd.s32 %s44, 1
      %p48 = scmp.eq.s32.totalorder %s10, 1
      %p49 = scmp.ne.s32.totalorder %s44, %s46
      %p50 = scmp.eq.s32.totalorder %s10, 0
      %p51 = por %p49, %p50
      %p52 = scmp.ne.s32.totalorder %s44, %s46
      %p53 = scmp.eq.s32.totalorder %s15, 1
      %p54 = por %p52, %p53
      %p55 = scmp.ne.s32.totalorder %s46, %s47
      %p56 = scmp.eq.s32.totalorder %s15, 0
      %p57 = por %p55, %p56
      %p58 = scmp.ne.s32.totalorder %s46, %s47
      %p59 = scmp.eq.s32.totalorder %s16, 1
      %p60 = por %p58, %p59
      %p62 = scmp.ne.s32.totalorder %s47, %s61
      %p63 = scmp.eq.s32.totalorder %s16, 0
      %p64 = por %p62, %p63
      %s66 = sadd.s32 %s65, 1
      %p69 = scmp.eq.s32.totalorder %s10, 1
      %p70 = scmp.ne.s32.totalorder %s65, %s67
      %p71 = scmp.eq.s32.totalorder %s10, 0
      %p72 = por %p70, %p71
      %p73 = scmp.ne.s32.totalorder %s65, %s67
      %p74 = scmp.eq.s32.totalorder %s15, 1
      %p75 = por %p73, %p74
      %p76 = scmp.ne.s32.totalorder %s67, %s68
      %p77 = scmp.eq.s32.totalorder %s15, 0
      %p78 = por %p76, %p77
      %p79 = scmp.ne.s32.totalorder %s67, %s68
      %p80 = scmp.eq.s32.totalorder %s16, 1
      %p81 = por %p79, %p80
      %p83 = scmp.ne.s32.totalorder %s68, %s82
      %p84 = scmp.eq.s32.totalorder %s16, 0
      %p85 = por %p83, %p84
      %s86 = ssub.s32 %s10, %s17
      %p87 = scmp.eq.s32.totalorder %s86, 0
      %s89 = sadd.s32 %s88, 1
      %s90 = scalar_select %p87, %s88, %s89
      %p93 = pneg %p87
      %p94 = scmp.eq.s32.totalorder %s10, 1
      %p95 = por %p93, %p94
      %p96 = scmp.ne.s32.totalorder %s88, %s91
      %p97 = scmp.eq.s32.totalorder %s10, 0
      %p98 = por %p96, %p97
      %p99 = scmp.ne.s32.totalorder %s88, %s91
      %p100 = scmp.eq.s32.totalorder %s15, 1
      %p101 = por %p99, %p100
      %p102 = scmp.ne.s32.totalorder %s91, %s92
      %p103 = scmp.eq.s32.totalorder %s15, 0
      %p104 = por %p102, %p103
      %p105 = scmp.ne.s32.totalorder %s91, %s92
      %p106 = scmp.eq.s32.totalorder %s16, 1
      %p107 = por %p105, %p106
      %p109 = scmp.ne.s32.totalorder %s92, %s108
      %p110 = scmp.eq.s32.totalorder %s16, 0
      %p111 = por %p109, %p110
      %p112 = scmp.le.s32.totalorder 1, %s10
      %p113 = scmp.lt.s32.totalorder %s10, 3
      %p114 = pnand %p112, %p113
      %p115 = pneg %p114
      // Predicated region
      $region9: #{tpu_custom_call.1} parent=5 // pred_check
        _
      $region10: #{tpu_custom_call.1} parent=5 // pred_check_branch
        %117 = sbr.rel (%p114) target = $region12
      $region11: #{tpu_custom_call.1} parent=5 // pred_region
        %s118 = ssub.s32 %s10, 1
        // Predicated region
        $region13: #{tpu_custom_call.1} parent=11 // pred_check
          %p119 = pneg %p57
        $region14: #{tpu_custom_call.1} parent=11 // pred_check_branch
          %121 = sbr.rel (%p119) target = $region16
        $region15: #{tpu_custom_call.1} parent=11 // pred_region
          %123 = vsyncadd [#allocation3], 0
          %s124 = sshll.u32 %s1, 4
          %s125 = int_to_ptr.hbm [resolvable:$true] %s124
          %s126 = sshll.u32 [#allocation2], 4
          %s127 = int_to_ptr.vmem [resolvable:$true] %s126
          %132 = dma.hbm_to_vmem [thread:$0]  %s125, 5120, %s127, [#allocation3], 64, 64, 4
        $region16: #{tpu_custom_call.1} parent=11 // pred_fallthru
          _
        // Predicated region
        $region17: #{tpu_custom_call.1} parent=11 // pred_check
          %p133 = pneg %p78
        $region18: #{tpu_custom_call.1} parent=11 // pred_check_branch
          %135 = sbr.rel (%p133) target = $region20
        $region19: #{tpu_custom_call.1} parent=11 // pred_region
          _
        $region20: #{tpu_custom_call.1} parent=11 // pred_fallthru
          _
      $region12: #{tpu_custom_call.1} parent=5 // pred_fallthru
        _
      %p136 = scmp.lt.s32.totalorder %s10, 2
      // Predicated region
      $region21: #{tpu_custom_call.1} parent=5 // pred_check
        %p137 = pneg %p136
      $region22: #{tpu_custom_call.1} parent=5 // pred_check_branch
        %139 = sbr.rel (%p137) target = $region24
      $region23: #{tpu_custom_call.1} parent=5 // pred_region
        // Predicated region
        $region25: #{tpu_custom_call.1} parent=23 // pred_check
          %p140 = pneg %p30
        $region26: #{tpu_custom_call.1} parent=23 // pred_check_branch
          %142 = sbr.rel (%p140) target = $region28
        $region27: #{tpu_custom_call.1} parent=23 // pred_region
          %p143 = scmp.lt.s32.totalorder %s10, 1
          %s144 = scalar_select %p143, %s10, 1
          %s145 = smul.addr %s144, 8
          %s146 = scalar_lea.vmem %s0, %s145
        $region28: #{tpu_custom_call.1} parent=23 // pred_fallthru
          _
      $region24: #{tpu_custom_call.1} parent=5 // pred_fallthru
        _
      %p147 = scmp.le.s32.totalorder 1, %s10
      %p148 = scmp.lt.s32.totalorder %s10, 3
      %p149 = pnand %p147, %p148
      %p150 = pneg %p149
      // Predicated region
      $region29: #{tpu_custom_call.1} parent=5 // pred_check
        _
      $region30: #{tpu_custom_call.1} parent=5 // pred_check_branch
        %152 = sbr.rel (%p149) target = $region32
      $region31: #{tpu_custom_call.1} parent=5 // pred_region
        %s153 = ssub.s32 %s10, 1
        // Predicated region
        $region33: #{tpu_custom_call.1} parent=31 // pred_check
          %p154 = pneg %p57
        $region34: #{tpu_custom_call.1} parent=31 // pred_check_branch
          %156 = sbr.rel (%p154) target = $region36
        $region35: #{tpu_custom_call.1} parent=31 // pred_region
          %158 = dma.done [#allocation3], 5120
        $region36: #{tpu_custom_call.1} parent=31 // pred_fallthru
          _
        %p159 = scmp.lt.s32.totalorder %s15, 1
        %s160 = scalar_select %p159, %s15, 1
        %s161 = smul.addr %s160, 8
        %s162 = scalar_lea.vmem %s0, %s161
        %p163 = pneg %p36
        %p164 = pneg %p33
        %p165 = pneg %p57
        %p166 = pneg %p54
        %p167 = pneg %p78
        %p168 = pneg %p75
        %p169 = pneg %p104
        %p170 = pneg %p101
        %p171 = scmp.lt.s32.totalorder %s15, 1
        %s172 = scalar_select %p171, %s15, 1
        %s173 = smul.addr %s172, 8
        %s174 = scalar_lea.vmem %s3, %s173
        %p175 = scmp.lt.s32.totalorder %s15, 1
        %s176 = scalar_select %p175, %s15, 1
        %s177 = smul.addr %s176, 8
        %s178 = scalar_lea.vmem %s0, %s177
        %p179 = scmp.lt.s32.totalorder %s15, 1
        %s180 = scalar_select %p179, %s15, 1
        %s181 = smul.addr %s180, 8
        %s182 = scalar_lea.vmem %s3, %s181
        %v183 = vld [vmem:[%s178] sm:$0xff]
        %v184 = vld [vmem:[#allocation2] sm:$0x1]
        %v185 = vunpack.c.l.bf16 %v184
        %187 = vset.pattern.permute.xlu0 0
        %188 = vperm.xlu0 %187, %v183
        %v189 = vpop.permute.xlu0 %188
        %v191 = vperm.slane %v185, 0
        %v192 = vmul.f32 %v189, %v191
        %193 = vset.pattern.permute.xlu0 1
        %194 = vperm.xlu0 %193, %v183
        %v195 = vpop.permute.xlu0 %194
        %v197 = vperm.slane %v185, 1
        %v198 = vmul.f32 %v195, %v197
        %v199 = vadd.f32 %v192, %v198
        %v200 = vld [vmem:[%s2] sm:$0x1]
        %v202 = vperm.slane %v200, 0
        %v204 = vadd.f32 %v199, %v202
        %v205 = vmax.f32 %v204, 0.0
        %v206 = vpack.c.bf16 %v205, %v205
        %s207 = scalar_lea.vmem [#allocation2], 64
        %v208 = vld [vmem:[%s207] sm:$0xf]
        %v209 = vld [vmem:[%s207 + $0x4] sm:$0xf]
        %v210 = vld [vmem:[%s207 + $0x8] sm:$0xf]
        %v211 = vld [vmem:[%s207 + $0xc] sm:$0xf]
        %v212 = vld [vmem:[%s207 + $0x10] sm:$0xf]
        %v213 = vld [vmem:[%s207 + $0x14] sm:$0xf]
        %v214 = vld [vmem:[%s207 + $0x18] sm:$0xf]
        %v215 = vld [vmem:[%s207 + $0x1c] sm:$0xf]
        %v216 = vld [vmem:[%s207 + $0x20] sm:$0xf]
        %v217 = vld [vmem:[%s207 + $0x24] sm:$0xf]
        %v218 = vld [vmem:[%s207 + $0x28] sm:$0xf]
        %v219 = vld [vmem:[%s207 + $0x2c] sm:$0xf]
        %v220 = vld [vmem:[%s207 + $0x30] sm:$0xf]
        %v221 = vld [vmem:[%s207 + $0x34] sm:$0xf]
        %v222 = vld [vmem:[%s207 + $0x38] sm:$0xf]
        %v223 = vld [vmem:[%s207 + $0x3c] sm:$0xf]
        %s224 = scalar_lea.vmem %s2, 1
        %v225 = vld [vmem:[%s224] sm:$0x1]
        %v227 = vperm.slane %v225, 0
        %v245 = vunpack.c.l.b16 %v208
        %v246 = vunpack.c.l.b16 %v209
        %v247 = vunpack.c.l.b16 %v210
        %v248 = vunpack.c.l.b16 %v211
        %v249 = vunpack.c.l.b16 %v212
        %v250 = vunpack.c.l.b16 %v213
        %v251 = vunpack.c.l.b16 %v214
        %v252 = vunpack.c.l.b16 %v215
        %v253 = vunpack.c.l.b16 %v216
        %v254 = vunpack.c.l.b16 %v217
        %v255 = vunpack.c.l.b16 %v218
        %v256 = vunpack.c.l.b16 %v219
        %v257 = vunpack.c.l.b16 %v220
        %v258 = vunpack.c.l.b16 %v221
        %v259 = vunpack.c.l.b16 %v222
        %v260 = vunpack.c.l.b16 %v223
        %v261 = vpack.c.b16 %v246, %v245
        %v262 = vpack.c.b16 %v248, %v247
        %v263 = vpack.c.b16 %v250, %v249
        %v264 = vpack.c.b16 %v252, %v251
        %v265 = vpack.c.b16 %v254, %v253
        %v266 = vpack.c.b16 %v256, %v255
        %v267 = vpack.c.b16 %v258, %v257
        %v268 = vpack.c.b16 %v260, %v259
        %277 = vmatpush.bf16.msra.mxu0 %v268
        %278 = vmatpush.bf16.msra.mxu0 %v267
        %279 = vmatpush.bf16.msra.mxu0 %v266
        %280 = vmatpush.bf16.msra.mxu0 %v265
        %281 = vmatpush.bf16.msra.mxu0 %v264
        %282 = vmatpush.bf16.msra.mxu0 %v263
        %283 = vmatpush.bf16.msra.mxu0 %v262
        %284 = vmatpush.bf16.msra.mxu0 %v261
        %285 = vmatmul.bf16.gmra.mxu0 %v206
        %v286 = vpop.f32.mrf.mxu0
        %v287 = vadd.f32 %v227, %v286
        %v288 = vpop.f32.mrf.mxu0
        %289 = vdwg.mxu0
        %v290 = vmax.f32 %v287, 0.0
        %v291 = vpack.c.bf16 %v290, %v290
        %s292 = scalar_lea.vmem [#allocation2], 128
        %v293 = vld [vmem:[%s292] sm:$0xf]
        %v294 = vld [vmem:[%s292 + $0x4] sm:$0xf]
        %v295 = vld [vmem:[%s292 + $0x8] sm:$0xf]
        %v296 = vld [vmem:[%s292 + $0xc] sm:$0xf]
        %v297 = vld [vmem:[%s292 + $0x10] sm:$0xf]
        %v298 = vld [vmem:[%s292 + $0x14] sm:$0xf]
        %v299 = vld [vmem:[%s292 + $0x18] sm:$0xf]
        %v300 = vld [vmem:[%s292 + $0x1c] sm:$0xf]
        %v301 = vld [vmem:[%s292 + $0x20] sm:$0xf]
        %v302 = vld [vmem:[%s292 + $0x24] sm:$0xf]
        %v303 = vld [vmem:[%s292 + $0x28] sm:$0xf]
        %v304 = vld [vmem:[%s292 + $0x2c] sm:$0xf]
        %v305 = vld [vmem:[%s292 + $0x30] sm:$0xf]
        %v306 = vld [vmem:[%s292 + $0x34] sm:$0xf]
        %v307 = vld [vmem:[%s292 + $0x38] sm:$0xf]
        %v308 = vld [vmem:[%s292 + $0x3c] sm:$0xf]
        %s309 = scalar_lea.vmem %s2, 2
        %v310 = vld [vmem:[%s309] sm:$0x1]
        %v312 = vperm.slane %v310, 0
        %v330 = vunpack.c.l.b16 %v293
        %v331 = vunpack.c.l.b16 %v294
        %v332 = vunpack.c.l.b16 %v295
        %v333 = vunpack.c.l.b16 %v296
        %v334 = vunpack.c.l.b16 %v297
        %v335 = vunpack.c.l.b16 %v298
        %v336 = vunpack.c.l.b16 %v299
        %v337 = vunpack.c.l.b16 %v300
        %v338 = vunpack.c.l.b16 %v301
        %v339 = vunpack.c.l.b16 %v302
        %v340 = vunpack.c.l.b16 %v303
        %v341 = vunpack.c.l.b16 %v304
        %v342 = vunpack.c.l.b16 %v305
        %v343 = vunpack.c.l.b16 %v306
        %v344 = vunpack.c.l.b16 %v307
        %v345 = vunpack.c.l.b16 %v308
        %v346 = vpack.c.b16 %v331, %v330
        %v347 = vpack.c.b16 %v333, %v332
        %v348 = vpack.c.b16 %v335, %v334
        %v349 = vpack.c.b16 %v337, %v336
        %v350 = vpack.c.b16 %v339, %v338
        %v351 = vpack.c.b16 %v341, %v340
        %v352 = vpack.c.b16 %v343, %v342
        %v353 = vpack.c.b16 %v345, %v344
        %362 = vmatpush.bf16.msra.mxu0 %v353
        %363 = vmatpush.bf16.msra.mxu0 %v352
        %364 = vmatpush.bf16.msra.mxu0 %v351
        %365 = vmatpush.bf16.msra.mxu0 %v350
        %366 = vmatpush.bf16.msra.mxu0 %v349
        %367 = vmatpush.bf16.msra.mxu0 %v348
        %368 = vmatpush.bf16.msra.mxu0 %v347
        %369 = vmatpush.bf16.msra.mxu0 %v346
        %370 = vmatmul.bf16.gmra.mxu0 %v291
        %v371 = vpop.f32.mrf.mxu0
        %v372 = vadd.f32 %v312, %v371
        %v373 = vpop.f32.mrf.mxu0
        %374 = vdwg.mxu0
        %v375 = vmax.f32 %v372, 0.0
        %v376 = vpack.c.bf16 %v375, %v375
        %s377 = scalar_lea.vmem [#allocation2], 192
        %v378 = vld [vmem:[%s377] sm:$0xf]
        %v379 = vld [vmem:[%s377 + $0x4] sm:$0xf]
        %v380 = vld [vmem:[%s377 + $0x8] sm:$0xf]
        %v381 = vld [vmem:[%s377 + $0xc] sm:$0xf]
        %v382 = vld [vmem:[%s377 + $0x10] sm:$0xf]
        %v383 = vld [vmem:[%s377 + $0x14] sm:$0xf]
        %v384 = vld [vmem:[%s377 + $0x18] sm:$0xf]
        %v385 = vld [vmem:[%s377 + $0x1c] sm:$0xf]
        %v386 = vld [vmem:[%s377 + $0x20] sm:$0xf]
        %v387 = vld [vmem:[%s377 + $0x24] sm:$0xf]
        %v388 = vld [vmem:[%s377 + $0x28] sm:$0xf]
        %v389 = vld [vmem:[%s377 + $0x2c] sm:$0xf]
        %v390 = vld [vmem:[%s377 + $0x30] sm:$0xf]
        %v391 = vld [vmem:[%s377 + $0x34] sm:$0xf]
        %v392 = vld [vmem:[%s377 + $0x38] sm:$0xf]
        %v393 = vld [vmem:[%s377 + $0x3c] sm:$0xf]
        %s394 = scalar_lea.vmem %s2, 3
        %v395 = vld [vmem:[%s394] sm:$0x1]
        %v397 = vperm.slane %v395, 0
        %v415 = vunpack.c.l.b16 %v378
        %v416 = vunpack.c.l.b16 %v379
        %v417 = vunpack.c.l.b16 %v380
        %v418 = vunpack.c.l.b16 %v381
        %v419 = vunpack.c.l.b16 %v382
        %v420 = vunpack.c.l.b16 %v383
        %v421 = vunpack.c.l.b16 %v384
        %v422 = vunpack.c.l.b16 %v385
        %v423 = vunpack.c.l.b16 %v386
        %v424 = vunpack.c.l.b16 %v387
        %v425 = vunpack.c.l.b16 %v388
        %v426 = vunpack.c.l.b16 %v389
        %v427 = vunpack.c.l.b16 %v390
        %v428 = vunpack.c.l.b16 %v391
        %v429 = vunpack.c.l.b16 %v392
        %v430 = vunpack.c.l.b16 %v393
        %v431 = vpack.c.b16 %v416, %v415
        %v432 = vpack.c.b16 %v418, %v417
        %v433 = vpack.c.b16 %v420, %v419
        %v434 = vpack.c.b16 %v422, %v421
        %v435 = vpack.c.b16 %v424, %v423
        %v436 = vpack.c.b16 %v426, %v425
        %v437 = vpack.c.b16 %v428, %v427
        %v438 = vpack.c.b16 %v430, %v429
        %447 = vmatpush.bf16.msra.mxu0 %v438
        %448 = vmatpush.bf16.msra.mxu0 %v437
        %449 = vmatpush.bf16.msra.mxu0 %v436
        %450 = vmatpush.bf16.msra.mxu0 %v435
        %451 = vmatpush.bf16.msra.mxu0 %v434
        %452 = vmatpush.bf16.msra.mxu0 %v433
        %453 = vmatpush.bf16.msra.mxu0 %v432
        %454 = vmatpush.bf16.msra.mxu0 %v431
        %455 = vmatmul.bf16.gmra.mxu0 %v376
        %v456 = vpop.f32.mrf.mxu0
        %v457 = vadd.f32 %v397, %v456
        %v458 = vpop.f32.mrf.mxu0
        %459 = vdwg.mxu0
        %v460 = vmax.f32 %v457, 0.0
        %v461 = vpack.c.bf16 %v460, %v460
        %s462 = scalar_lea.vmem [#allocation2], 256
        %v463 = vld [vmem:[%s462] sm:$0xf]
        %v464 = vld [vmem:[%s462 + $0x4] sm:$0xf]
        %v465 = vld [vmem:[%s462 + $0x8] sm:$0xf]
        %v466 = vld [vmem:[%s462 + $0xc] sm:$0xf]
        %v467 = vld [vmem:[%s462 + $0x10] sm:$0xf]
        %v468 = vld [vmem:[%s462 + $0x14] sm:$0xf]
        %v469 = vld [vmem:[%s462 + $0x18] sm:$0xf]
        %v470 = vld [vmem:[%s462 + $0x1c] sm:$0xf]
        %v471 = vld [vmem:[%s462 + $0x20] sm:$0xf]
        %v472 = vld [vmem:[%s462 + $0x24] sm:$0xf]
        %v473 = vld [vmem:[%s462 + $0x28] sm:$0xf]
        %v474 = vld [vmem:[%s462 + $0x2c] sm:$0xf]
        %v475 = vld [vmem:[%s462 + $0x30] sm:$0xf]
        %v476 = vld [vmem:[%s462 + $0x34] sm:$0xf]
        %v477 = vld [vmem:[%s462 + $0x38] sm:$0xf]
        %v478 = vld [vmem:[%s462 + $0x3c] sm:$0xf]
        %s479 = scalar_lea.vmem %s2, 4
        %v480 = vld [vmem:[%s479] sm:$0x1]
        %v482 = vperm.slane %v480, 0
        %v500 = vunpack.c.l.b16 %v463
        %v501 = vunpack.c.l.b16 %v464
        %v502 = vunpack.c.l.b16 %v465
        %v503 = vunpack.c.l.b16 %v466
        %v504 = vunpack.c.l.b16 %v467
        %v505 = vunpack.c.l.b16 %v468
        %v506 = vunpack.c.l.b16 %v469
        %v507 = vunpack.c.l.b16 %v470
        %v508 = vunpack.c.l.b16 %v471
        %v509 = vunpack.c.l.b16 %v472
        %v510 = vunpack.c.l.b16 %v473
        %v511 = vunpack.c.l.b16 %v474
        %v512 = vunpack.c.l.b16 %v475
        %v513 = vunpack.c.l.b16 %v476
        %v514 = vunpack.c.l.b16 %v477
        %v515 = vunpack.c.l.b16 %v478
        %v516 = vpack.c.b16 %v501, %v500
        %v517 = vpack.c.b16 %v503, %v502
        %v518 = vpack.c.b16 %v505, %v504
        %v519 = vpack.c.b16 %v507, %v506
        %v520 = vpack.c.b16 %v509, %v508
        %v521 = vpack.c.b16 %v511, %v510
        %v522 = vpack.c.b16 %v513, %v512
        %v523 = vpack.c.b16 %v515, %v514
        %532 = vmatpush.bf16.msra.mxu0 %v523
        %533 = vmatpush.bf16.msra.mxu0 %v522
        %534 = vmatpush.bf16.msra.mxu0 %v521
        %535 = vmatpush.bf16.msra.mxu0 %v520
        %536 = vmatpush.bf16.msra.mxu0 %v519
        %537 = vmatpush.bf16.msra.mxu0 %v518
        %538 = vmatpush.bf16.msra.mxu0 %v517
        %539 = vmatpush.bf16.msra.mxu0 %v516
        %540 = vmatmul.bf16.gmra.mxu0 %v461
        %v541 = vpop.f32.mrf.mxu0
        %v542 = vadd.f32 %v482, %v541
        %v543 = vpop.f32.mrf.mxu0
        %544 = vdwg.mxu0
        %vm545 = vcmask 15360
        %546 = vst.msk [vmem:[%s182] sm:$0xff] %vm545, %v542
        %p547 = scmp.lt.s32.totalorder %s15, 1
        %s548 = scalar_select %p547, %s15, 1
        %s549 = smul.addr %s548, 8
        %s550 = scalar_lea.vmem %s3, %s549
        // Predicated region
        $region37: #{tpu_custom_call.1} parent=31 // pred_check
          %p551 = pneg %p101
        $region38: #{tpu_custom_call.1} parent=31 // pred_check_branch
          %553 = sbr.rel (%p551) target = $region40
        $region39: #{tpu_custom_call.1} parent=31 // pred_region
          _
        $region40: #{tpu_custom_call.1} parent=31 // pred_fallthru
          _
      $region32: #{tpu_custom_call.1} parent=5 // pred_fallthru
        _
      %p554 = scmp.le.s32.totalorder 2, %s10
      // Predicated region
      $region41: #{tpu_custom_call.1} parent=5 // pred_check
        %p555 = pneg %p554
      $region42: #{tpu_custom_call.1} parent=5 // pred_check_branch
        %557 = sbr.rel (%p555) target = $region44
      $region43: #{tpu_custom_call.1} parent=5 // pred_region
        %s558 = ssub.s32 %s10, 2
        // Predicated region
        $region45: #{tpu_custom_call.1} parent=43 // pred_check
          %p559 = pneg %p107
        $region46: #{tpu_custom_call.1} parent=43 // pred_check_branch
          %561 = sbr.rel (%p559) target = $region48
        $region47: #{tpu_custom_call.1} parent=43 // pred_region
          %p562 = scmp.lt.s32.totalorder %s16, 1
          %s563 = scalar_select %p562, %s16, 1
          %s564 = smul.addr %s563, 8
          %s565 = scalar_lea.vmem %s3, %s564
        $region48: #{tpu_custom_call.1} parent=43 // pred_fallthru
          _
      $region44: #{tpu_custom_call.1} parent=5 // pred_fallthru
        _
    $region6: #{tpu_custom_call.1} parent=1 // loop_footer
      %s14 = sadd.s32 1, %s10
    $region7: #{tpu_custom_call.1} parent=1 // loop_footer_branch
      %9 = sbr.rel target = $region3
    $region8: #{tpu_custom_call.1} parent=1 // loop_exit
      _
    %566 = vsyncpa [#allocation3], 1
    %s567 = scalar_lea.sflag [#allocation3], 1
    %568 = vsyncpa %s567, 1

</llo_original>
